<compile_context>
chip_gen: v6e
topology: v6e:2x2x1
jax: 0.10.0
libtpu: 0.0.40
codegen_flags: <defaults>
</compile_context>

<pallas_src>
import jax
import jax.numpy as jnp
from jax import lax
from jax.experimental import pallas as pl
from jax.experimental.pallas import tpu as pltpu

# Model hyper-parameters (consistent with the module's __init__)
EMBEDDING_DIM = 32
HEAD_DIM = 16


def _head_kernel(x_ref, wqkv_ref, bias_ref, o_ref):
    # x_ref:    (R, E)   flattened (batch*time) rows for this grid step
    # wqkv_ref: (E, 3H)  fused [W_q * 1/sqrt(H) | W_k | W_v]
    # bias_ref: (R, R)   additive mask: 0 where attention is allowed
    #                    (same batch element AND causal), -inf elsewhere
    # o_ref:    (R, H)   output rows
    h = o_ref.shape[-1]
    mm_dtype = x_ref.dtype        # bf16 on v5e, f32 elsewhere

    # Single fused QKV projection: one dense MXU pass over all rows.
    qkv = jnp.dot(x_ref[...], wqkv_ref[...],
                  preferred_element_type=jnp.float32)             # (R, 3H)
    q = qkv[:, 0 * h:1 * h].astype(mm_dtype)   # scale folded into W_q columns
    k = qkv[:, 1 * h:2 * h].astype(mm_dtype)
    v = qkv[:, 2 * h:3 * h].astype(mm_dtype)

    # Block-diagonal attention: ONE (R,H)x(H,R) matmul for all batch rows
    # (contract the last dims -> q @ k^T without an explicit transpose).
    scores = lax.dot_general(q, k, (((1,), (1,)), ((), ())),
                             preferred_element_type=jnp.float32)  # (R, R)
    masked = scores + bias_ref[...]

    # Softmax along the last axis (f32; reciprocal runs on the EUP slot).
    m = jnp.max(masked, axis=-1, keepdims=True)
    ex = jnp.exp(masked - m)
    denom = jnp.sum(ex, axis=-1, keepdims=True)
    attn = ex * pl.reciprocal(denom, approx=True)                 # (R, R)

    # attn @ V: ONE (R,R)x(R,H) matmul; cross-batch weights are exactly zero.
    out = jnp.dot(attn.astype(mm_dtype), v,
                  preferred_element_type=jnp.float32)             # (R, H)
    o_ref[...] = out.astype(o_ref.dtype)


def _matmul_dtype():
    """bf16 matmul operands on v5e (no f32 MXU path); f32 elsewhere."""
    try:
        kind = jax.devices()[0].device_kind.lower()
    except Exception:
        return jnp.float32
    if ("v5e" in kind) or ("v5 lite" in kind) or ("v5lite" in kind):
        return jnp.bfloat16
    return jnp.float32


def _num_tensorcores():
    """Best-effort TensorCore count per device (v7x has 2, v5e/v6e have 1)."""
    try:
        return max(1, int(getattr(jax.devices()[0], "num_cores", 1)))
    except Exception:
        return 1


def _pick_batch_block(B, T, num_cores):
    """Largest bblk keeping R = bblk*T near the 256-512-row MXU sweet spot."""
    target_rows = 512
    bblk = max(1, min(B, target_rows // max(T, 1)))
    # Only split the grid across TensorCores when each core still gets a
    # substantial tile (>= 256 rows); otherwise one grid step on one TC wins
    # (each grid step carries ~0.35us of fixed pipeline overhead).
    if num_cores > 1 and B > 1:
        per_core = pl.cdiv(B, num_cores)
        if per_core * T >= 256:
            bblk = min(bblk, per_core)
    return bblk


@jax.jit
def head_forward(x, w_q, w_k, w_v):
    """x: (B, T, E) float32; w_*: (E, H) float32. Returns (B, T, H) float32."""
    B, T, E = x.shape
    H = w_q.shape[1]
    mm_dtype = _matmul_dtype()

    # Fold the 1/sqrt(H) scale into W_q and fuse the three projections.
    scale = jnp.float32(1.0) / jnp.sqrt(jnp.float32(H))
    w_qkv = jnp.concatenate([w_q * scale, w_k, w_v], axis=1).astype(mm_dtype)

    bblk = _pick_batch_block(B, T, _num_tensorcores())
    n_blocks = pl.cdiv(B, bblk)
    b_pad = n_blocks * bblk
    R = bblk * T

    # Flatten (and, if needed, zero-pad) the batch into MXU rows in the
    # wrapper — a free XLA layout change, not an in-kernel relayout.
    x_flat = x.reshape(B * T, E)
    if b_pad != B:
        x_flat = jnp.pad(x_flat, ((0, (b_pad - B) * T), (0, 0)))
    x_flat = x_flat.astype(mm_dtype)

    # Additive bias over one flattened block's rows: 0 where attention is
    # allowed (same batch element AND causal), -inf elsewhere.  Every row
    # keeps its unmasked diagonal, so no row is fully masked (no NaNs).
    rows = jnp.arange(R)
    same_batch = (rows[:, None] // T) == (rows[None, :] // T)
    causal = (rows[None, :] % T) <= (rows[:, None] % T)
    bias = jnp.where(same_batch & causal,
                     jnp.float32(0.0), jnp.float32(-jnp.inf))

    out_flat = pl.pallas_call(
        _head_kernel,
        out_shape=jax.ShapeDtypeStruct((b_pad * T, H), x.dtype),
        grid_spec=pltpu.PrefetchScalarGridSpec(
            num_scalar_prefetch=0,
            grid=(n_blocks,),
            in_specs=[
                pl.BlockSpec((R, E), lambda b: (b, 0)),
                pl.BlockSpec((E, 3 * H), lambda b: (0, 0)),
                pl.BlockSpec((R, R), lambda b: (0, 0)),
            ],
            out_specs=pl.BlockSpec((R, H), lambda b: (b, 0)),
        ),
        compiler_params=pltpu.CompilerParams(
            dimension_semantics=("parallel",)),
    )(x_flat, w_qkv, bias)

    return out_flat[:B * T].reshape(B, T, H)


def reference_forward(x, w_q, w_k, w_v):
    """Pure-JAX reference matching the PyTorch forward exactly."""
    q = x @ w_q
    k = x @ w_k
    v = x @ w_v
    scores = (q @ jnp.swapaxes(k, -2, -1)) / jnp.sqrt(jnp.float32(HEAD_DIM))
    t = scores.shape[-1]
    mask = jnp.triu(jnp.ones((t, t), dtype=bool), k=1)
    masked = jnp.where(mask, -jnp.inf, scores)
    attn = jax.nn.softmax(masked, axis=-1)
    return attn @ v


if __name__ == "__main__":
    key = jax.random.PRNGKey(0)
    k_x, k_q, k_k, k_v = jax.random.split(key, 4)

    B, T = 2, 8
    x = jax.random.normal(k_x, (B, T, EMBEDDING_DIM), dtype=jnp.float32)

    # Deterministic weight init: normal(mean=0, std=0.02), as in the module.
    w_q = 0.02 * jax.random.normal(k_q, (EMBEDDING_DIM, HEAD_DIM), dtype=jnp.float32)
    w_k = 0.02 * jax.random.normal(k_k, (EMBEDDING_DIM, HEAD_DIM), dtype=jnp.float32)
    w_v = 0.02 * jax.random.normal(k_v, (EMBEDDING_DIM, HEAD_DIM), dtype=jnp.float32)

    out = jax.block_until_ready(head_forward(x, w_q, w_k, w_v))

    ref = reference_forward(x, w_q, w_k, w_v)
    assert out.shape == (B, T, HEAD_DIM)
    # Tolerance accounts for the EUP approximate reciprocal in the softmax
    # denominator (~2^-12 relative) and for bf16 matmul operands on v5e.
    assert jnp.allclose(out, ref, atol=1e-3, rtol=1e-3)

    print("KERNEL_OK")
</pallas_src>

<mosaic_0001>
module attributes {stable_mosaic.version = 11 : i64} {
  func.func @_head_kernel(%arg0: i32, %arg1: memref<16x32xf32, #tpu.memory_space<vmem>>, %arg2: memref<32x48xf32, #tpu.memory_space<vmem>>, %arg3: memref<16x16xf32, #tpu.memory_space<vmem>>, %arg4: memref<16x16xf32, #tpu.memory_space<vmem>>) attributes {dimension_semantics = [#tpu.dimension_semantics<parallel>], iteration_bounds = array<i64: 1>, scalar_prefetch = 0 : i64, scratch_operands = 0 : i64, tpu.core_type = #tpu.core_type<tc>, window_params = [{transform_indices = @transform_0, window_bounds = array<i64: 16, 32>}, {pipeline_mode = #tpu.pipeline_mode<synchronous>, transform_indices = @transform_1, window_bounds = array<i64: 32, 48>}, {pipeline_mode = #tpu.pipeline_mode<synchronous>, transform_indices = @transform_2, window_bounds = array<i64: 16, 16>}, {transform_indices = @transform_3, window_bounds = array<i64: 16, 16>}]} {
    %c0 = arith.constant 0 : index
    %c0_0 = arith.constant 0 : index
    %0 = vector.load %arg1[%c0, %c0_0] : memref<16x32xf32, #tpu.memory_space<vmem>>, vector<16x32xf32>
    %c0_1 = arith.constant 0 : index
    %c0_2 = arith.constant 0 : index
    %1 = vector.load %arg2[%c0_1, %c0_2] : memref<32x48xf32, #tpu.memory_space<vmem>>, vector<32x48xf32>
    %cst = arith.constant dense<0.000000e+00> : vector<16x48xf32>
    %2 = tpu.matmul %0, %1, %cst {dimension_numbers = #tpu.dot_dimension_numbers<[1], [0], [0], [1], [0, 0, 1, 1], [], []>} : vector<16x32xf32>, vector<32x48xf32>, vector<16x48xf32> -> vector<16x48xf32>
    %3 = vector.extract_strided_slice %2 {offsets = [0, 0], sizes = [16, 16], strides = [1, 1]} : vector<16x48xf32> to vector<16x16xf32>
    %4 = vector.extract_strided_slice %2 {offsets = [0, 16], sizes = [16, 16], strides = [1, 1]} : vector<16x48xf32> to vector<16x16xf32>
    %5 = vector.extract_strided_slice %2 {offsets = [0, 32], sizes = [16, 16], strides = [1, 1]} : vector<16x48xf32> to vector<16x16xf32>
    %cst_3 = arith.constant dense<0.000000e+00> : vector<16x16xf32>
    %6 = tpu.matmul %3, %4, %cst_3 {dimension_numbers = #tpu.dot_dimension_numbers<[1], [1], [0], [0], [0, 0, 1, 0], [], []>} : vector<16x16xf32>, vector<16x16xf32>, vector<16x16xf32> -> vector<16x16xf32>
    %c0_4 = arith.constant 0 : index
    %c0_5 = arith.constant 0 : index
    %7 = vector.load %arg3[%c0_4, %c0_5] : memref<16x16xf32, #tpu.memory_space<vmem>>, vector<16x16xf32>
    %8 = arith.addf %6, %7 : vector<16x16xf32>
    %cst_6 = arith.constant dense<0xFF800000> : vector<16xf32>
    %9 = vector.multi_reduction <maximumf>, %8, %cst_6 [1] : vector<16x16xf32> to vector<16xf32>
    %10 = vector.shape_cast %9 : vector<16xf32> to vector<16x1xf32>
    %11 = vector.broadcast %10 : vector<16x1xf32> to vector<16x16xf32>
    %12 = arith.subf %8, %11 : vector<16x16xf32>
    %13 = math.exp %12 : vector<16x16xf32>
    %cst_7 = arith.constant dense<0.000000e+00> : vector<16xf32>
    %14 = vector.multi_reduction <add>, %13, %cst_7 [1] : vector<16x16xf32> to vector<16xf32>
    %15 = vector.shape_cast %14 : vector<16xf32> to vector<16x1xf32>
    %16 = tpu.reciprocal %15 {approx = true} : vector<16x1xf32> -> vector<16x1xf32>
    %17 = vector.broadcast %16 : vector<16x1xf32> to vector<16x16xf32>
    %18 = arith.mulf %13, %17 : vector<16x16xf32>
    %cst_8 = arith.constant dense<0.000000e+00> : vector<16x16xf32>
    %19 = tpu.matmul %18, %5, %cst_8 {dimension_numbers = #tpu.dot_dimension_numbers<[1], [0], [0], [1], [0, 0, 1, 1], [], []>} : vector<16x16xf32>, vector<16x16xf32>, vector<16x16xf32> -> vector<16x16xf32>
    %c0_9 = arith.constant 0 : index
    %c0_10 = arith.constant 0 : index
    %20 = vector.load %arg4[%c0_9, %c0_10] : memref<16x16xf32, #tpu.memory_space<vmem>>, vector<16x16xf32>
    tpu.vector_store %arg4[%c0_9, %c0_10], %19 {strides = array<i32>} : memref<16x16xf32, #tpu.memory_space<vmem>>, vector<16x16xf32>,
    return
  }
  func.func @transform_0(%arg0: i32) -> (i32, i32) {
    %c0_i32 = arith.constant 0 : i32
    %c0_i32_0 = arith.constant 0 : i32
    return %arg0, %c0_i32 : i32, i32
  }
  func.func @transform_1(%arg0: i32) -> (i32, i32) {
    %c0_i32 = arith.constant 0 : i32
    %c0_i32_0 = arith.constant 0 : i32
    %c0_i32_1 = arith.constant 0 : i32
    return %c0_i32, %c0_i32_0 : i32, i32
  }
  func.func @transform_2(%arg0: i32) -> (i32, i32) {
    %c0_i32 = arith.constant 0 : i32
    %c0_i32_0 = arith.constant 0 : i32
    %c0_i32_1 = arith.constant 0 : i32
    return %c0_i32, %c0_i32_0 : i32, i32
  }
  func.func @transform_3(%arg0: i32) -> (i32, i32) {
    %c0_i32 = arith.constant 0 : i32
    %c0_i32_0 = arith.constant 0 : i32
    return %arg0, %c0_i32 : i32, i32
  }
}

</mosaic_0001>

<llo_original>
// kernel: head_forward.1
$region0: #{head_forward.1}
  #allocation0 [shape = 'u32[]', space=smem, size = 0x4, offset = 0x4, fixed_abs, tag = 'smem constant byte address 0x4 - core index']
  #allocation1 [shape = 'u32[144,128]{1,0:T(1,128)}', space=vmem, size = 0x12000, scoped, tag = 'internal scratch']
  %s0 = inlined_call_operand.vmem [shape: f32[16,32], index: 0, kind: input, shape index: {}]
  %s1 = inlined_call_operand.vmem [shape: f32[32,48], index: 1, kind: input, shape index: {}]
  %s2 = inlined_call_operand.vmem [shape: f32[16,16], index: 2, kind: input, shape index: {}]
  %s3 = inlined_call_operand.hbm [shape: f32[16,16], index: 3, kind: output, shape index: {}]
  %s4 = sld [smem:[#allocation0]]
  $region22: #{head_forward.1} parent=0
    _
  %s6 = ssub.s32 1, %s4
  %s7 = scalar_select 0, %s6, %s4
  $region1: #{head_forward.1} parent=0
    #allocation2 [shape = 'u8[8192]{0}', space=vmem, size = 0x2000, scoped, tag = 'output window, operand 0, single buffered']
    #allocation3 [shape = 's32[1]{0}', space=sflag, size = 0x4, scoped, tag = 'scoped memory for head_forward.1']
    %8 = vsyncpa [#allocation3], 0
    // Predicated region
    $region2: #{head_forward.1} parent=1 // pred_check
      _
    $region3: #{head_forward.1} parent=1 // pred_check_branch
      %10 = sbr.rel (0) target = $region5
    $region4: #{head_forward.1} parent=1 // pred_region
      _
    $region5: #{head_forward.1} parent=1 // pred_fallthru
      _
    // Predicated region
    $region6: #{head_forward.1} parent=1 // pred_check
      _
    $region7: #{head_forward.1} parent=1 // pred_check_branch
      %12 = sbr.rel (0) target = $region9
    $region8: #{head_forward.1} parent=1 // pred_region
      _
    $region9: #{head_forward.1} parent=1 // pred_fallthru
      _
    // Predicated region
    $region10: #{head_forward.1} parent=1 // pred_check
      _
    $region11: #{head_forward.1} parent=1 // pred_check_branch
      %14 = sbr.rel (0) target = $region13
    $region12: #{head_forward.1} parent=1 // pred_region
      _
    $region13: #{head_forward.1} parent=1 // pred_fallthru
      _
    %v15 = vld [vmem:[%s0] sm:$0xff]
    %v16 = vld [vmem:[%s0 + $0x8] sm:$0xff]
    %v17 = vld [vmem:[%s1] sm:$0xff]
    %v18 = vld [vmem:[%s1 + $0x8] sm:$0xff]
    %v19 = vld [vmem:[%s1 + $0x10] sm:$0xff]
    %v20 = vld [vmem:[%s1 + $0x18] sm:$0xff]
    %vm21 = vcmask 261120
    %v23 = vsel %vm21, %v15, 0
    %v26 = vsel %vm21, %v16, 0
    %28 = vmatprep.subr.mxu0 0.0
    %29 = vmatpush1.msra.mxu0 0.0
    %30 = vmatprep.subr.mxu0 0.0
    %31 = vmatpush1.msra.mxu0 0.0
    %32 = vmatprep.subr.mxu0 0.0
    %33 = vmatpush1.msra.mxu0 0.0
    %34 = vmatprep.subr.mxu0 0.0
    %35 = vmatpush1.msra.mxu0 0.0
    %36 = vmatprep.subr.mxu0 0.0
    %37 = vmatpush1.msra.mxu0 0.0
    %38 = vmatprep.subr.mxu0 0.0
    %39 = vmatpush1.msra.mxu0 0.0
    %40 = vmatprep.subr.mxu0 0.0
    %41 = vmatpush1.msra.mxu0 0.0
    %42 = vmatprep.subr.mxu0 0.0
    %43 = vmatpush1.msra.mxu0 0.0
    %44 = vmatprep.subr.mxu0 0.0
    %45 = vmatpush1.msra.mxu0 0.0
    %46 = vmatprep.subr.mxu0 0.0
    %47 = vmatpush1.msra.mxu0 0.0
    %48 = vmatprep.subr.mxu0 0.0
    %49 = vmatpush1.msra.mxu0 0.0
    %50 = vmatprep.subr.mxu0 0.0
    %51 = vmatpush1.msra.mxu0 0.0
    %52 = vmatprep.subr.mxu0 0.0
    %53 = vmatpush1.msra.mxu0 %v20
    %54 = vmatprep.subr.mxu0 0.0
    %55 = vmatpush1.msra.mxu0 %v19
    %56 = vmatprep.subr.mxu0 0.0
    %57 = vmatpush1.msra.mxu0 %v18
    %58 = vmatprep.subr.mxu0 0.0
    %59 = vmatpush1.msra.mxu0 %v17
    %60 = vmatprep.subr.mxu0 0.0
    %61 = vmatpush2.msra.mxu0 0.0
    %62 = vmatprep.subr.mxu0 0.0
    %63 = vmatpush2.msra.mxu0 0.0
    %64 = vmatprep.subr.mxu0 0.0
    %65 = vmatpush2.msra.mxu0 0.0
    %66 = vmatprep.subr.mxu0 0.0
    %67 = vmatpush2.msra.mxu0 0.0
    %68 = vmatprep.subr.mxu0 0.0
    %69 = vmatpush2.msra.mxu0 0.0
    %70 = vmatprep.subr.mxu0 0.0
    %71 = vmatpush2.msra.mxu0 0.0
    %72 = vmatprep.subr.mxu0 0.0
    %73 = vmatpush2.msra.mxu0 0.0
    %74 = vmatprep.subr.mxu0 0.0
    %75 = vmatpush2.msra.mxu0 0.0
    %76 = vmatprep.subr.mxu0 0.0
    %77 = vmatpush2.msra.mxu0 0.0
    %78 = vmatprep.subr.mxu0 0.0
    %79 = vmatpush2.msra.mxu0 0.0
    %80 = vmatprep.subr.mxu0 0.0
    %81 = vmatpush2.msra.mxu0 0.0
    %82 = vmatprep.subr.mxu0 0.0
    %83 = vmatpush2.msra.mxu0 0.0
    %84 = vmatprep.subr.mxu0 0.0
    %85 = vmatpush2.msra.mxu0 0.0
    %86 = vmatprep.subr.mxu0 0.0
    %87 = vmatpush2.msra.mxu0 0.0
    %88 = vmatprep.subr.mxu0 0.0
    %89 = vmatpush2.msra.mxu0 0.0
    %90 = vmatprep.subr.mxu0 0.0
    %91 = vmatpush2.msra.mxu0 0.0
    %92 = vmatprep.mubr.f32.mxu0 0.0
    %93 = vmatmul.mubr.f32.gmra.mxu0 %v23
    %v94 = vpop.f32.mrf.mxu0
    %v95 = vadd.f32 0.0, %v94
    %v96 = vpop.f32.mrf.mxu0
    %97 = vmatprep.mubr.f32.mxu0 0.0
    %98 = vmatmul.mubr.f32.gmra.mxu0 %v26
    %v99 = vpop.f32.mrf.mxu0
    %v100 = vadd.f32 0.0, %v99
    %v101 = vpop.f32.mrf.mxu0
    %102 = vdwg.mxu0
    %v103 = vld [vmem:[%s2] sm:$0xff]
    %v104 = vld [vmem:[%s2 + $0x8] sm:$0xff]
    %107 = vrot.lane.b32.xlu0 %v95, 112
    %v108 = vpop.permute.xlu0 %107
    %109 = vrot.lane.b32.xlu0 %v100, 112
    %v110 = vpop.permute.xlu0 %109
    %vm111 = vcmask 130048
    %v112 = vsel %vm111, %v95, 0
    %v114 = vsel %vm111, %v100, 0
    %v116 = vsel %vm111, %v108, 0
    %v118 = vsel %vm111, %v110, 0
    %120 = vmatprep.subr.mxu0 0.0
    %121 = vmatpush1.xpose.msra.mxu0 0.0
    %122 = vmatprep.subr.mxu0 0.0
    %123 = vmatpush1.xpose.msra.mxu0 0.0
    %124 = vmatprep.subr.mxu0 0.0
    %125 = vmatpush1.xpose.msra.mxu0 0.0
    %126 = vmatprep.subr.mxu0 0.0
    %127 = vmatpush1.xpose.msra.mxu0 0.0
    %128 = vmatprep.subr.mxu0 0.0
    %129 = vmatpush1.xpose.msra.mxu0 0.0
    %130 = vmatprep.subr.mxu0 0.0
    %131 = vmatpush1.xpose.msra.mxu0 0.0
    %132 = vmatprep.subr.mxu0 0.0
    %133 = vmatpush1.xpose.msra.mxu0 0.0
    %134 = vmatprep.subr.mxu0 0.0
    %135 = vmatpush1.xpose.msra.mxu0 0.0
    %136 = vmatprep.subr.mxu0 0.0
    %137 = vmatpush1.xpose.msra.mxu0 0.0
    %138 = vmatprep.subr.mxu0 0.0
    %139 = vmatpush1.xpose.msra.mxu0 0.0
    %140 = vmatprep.subr.mxu0 0.0
    %141 = vmatpush1.xpose.msra.mxu0 0.0
    %142 = vmatprep.subr.mxu0 0.0
    %143 = vmatpush1.xpose.msra.mxu0 0.0
    %144 = vmatprep.subr.mxu0 0.0
    %145 = vmatpush1.xpose.msra.mxu0 0.0
    %146 = vmatprep.subr.mxu0 0.0
    %147 = vmatpush1.xpose.msra.mxu0 0.0
    %148 = vmatprep.subr.mxu0 0.0
    %149 = vmatpush1.xpose.msra.mxu0 %v118
    %150 = vmatprep.subr.mxu0 0.0
    %151 = vmatpush1.xpose.msra.mxu0 %v116
    %152 = vmatprep.subr.mxu0 0.0
    %153 = vmatpush2.xpose.msra.mxu0 0.0
    %154 = vmatprep.subr.mxu0 0.0
    %155 = vmatpush2.xpose.msra.mxu0 0.0
    %156 = vmatprep.subr.mxu0 0.0
    %157 = vmatpush2.xpose.msra.mxu0 0.0
    %158 = vmatprep.subr.mxu0 0.0
    %159 = vmatpush2.xpose.msra.mxu0 0.0
    %160 = vmatprep.subr.mxu0 0.0
    %161 = vmatpush2.xpose.msra.mxu0 0.0
    %162 = vmatprep.subr.mxu0 0.0
    %163 = vmatpush2.xpose.msra.mxu0 0.0
    %164 = vmatprep.subr.mxu0 0.0
    %165 = vmatpush2.xpose.msra.mxu0 0.0
    %166 = vmatprep.subr.mxu0 0.0
    %167 = vmatpush2.xpose.msra.mxu0 0.0
    %168 = vmatprep.subr.mxu0 0.0
    %169 = vmatpush2.xpose.msra.mxu0 0.0
    %170 = vmatprep.subr.mxu0 0.0
    %171 = vmatpush2.xpose.msra.mxu0 0.0
    %172 = vmatprep.subr.mxu0 0.0
    %173 = vmatpush2.xpose.msra.mxu0 0.0
    %174 = vmatprep.subr.mxu0 0.0
    %175 = vmatpush2.xpose.msra.mxu0 0.0
    %176 = vmatprep.subr.mxu0 0.0
    %177 = vmatpush2.xpose.msra.mxu0 0.0
    %178 = vmatprep.subr.mxu0 0.0
    %179 = vmatpush2.xpose.msra.mxu0 0.0
    %180 = vmatprep.subr.mxu0 0.0
    %181 = vmatpush2.xpose.msra.mxu0 0.0
    %182 = vmatprep.subr.mxu0 0.0
    %183 = vmatpush2.xpose.msra.mxu0 0.0
    %184 = vmatprep.mubr.f32.mxu0 0.0
    %185 = vmatmul.mubr.f32.gmra.mxu0 %v112
    %v186 = vpop.f32.mrf.mxu0
    %v187 = vadd.f32 %v103, %v186
    %v188 = vpop.f32.mrf.mxu0
    %189 = vmatprep.mubr.f32.mxu0 0.0
    %190 = vmatmul.mubr.f32.gmra.mxu0 %v114
    %v191 = vpop.f32.mrf.mxu0
    %v192 = vadd.f32 %v104, %v191
    %v193 = vpop.f32.mrf.mxu0
    %194 = vdwg.mxu0
    %v195 = vsel %vm111, %v187, -inf
    %196 = vmax.xlane.f32.xlu0 %v195
    %v197 = vpop.xlane.xlu0 %196
    %v198 = vsel %vm111, %v192, -inf
    %199 = vmax.xlane.f32.xlu0 %v198
    %v200 = vpop.xlane.xlu0 %199
    %v201 = vsub.f32 %v187, %v197
    %v202 = vsub.f32 %v192, %v200
    %v203 = vmul.f32 %v201, 1.442695
    %v204 = vpow.pop %v203
    %v205 = vmul.f32 %v202, 1.442695
    %v206 = vpow.pop %v205
    %v207 = vsel %vm111, %v204, 0.0
    %208 = vadd.xlane.f32.xlu0 %v207
    %v209 = vpop.xlane.xlu0 %208
    %v210 = vsel %vm111, %v206, 0.0
    %211 = vadd.xlane.f32.xlu0 %v210
    %v212 = vpop.xlane.xlu0 %211
    %v213 = vrcp.pop %v209
    %v214 = vrcp.pop %v212
    %v215 = vmul.f32 %v204, %v213
    %v216 = vmul.f32 %v206, %v214
    %217 = vrot.lane.b32.xlu0 %v95, 96
    %v218 = vpop.permute.xlu0 %217
    %219 = vrot.lane.b32.xlu0 %v100, 96
    %v220 = vpop.permute.xlu0 %219
    %v224 = vsel %vm111, %v215, 0
    %v227 = vsel %vm111, %v216, 0
    %229 = vmatprep.subr.mxu0 0.0
    %230 = vmatpush1.msra.mxu0 0.0
    %231 = vmatprep.subr.mxu0 0.0
    %232 = vmatpush1.msra.mxu0 0.0
    %233 = vmatprep.subr.mxu0 0.0
    %234 = vmatpush1.msra.mxu0 0.0
    %235 = vmatprep.subr.mxu0 0.0
    %236 = vmatpush1.msra.mxu0 0.0
    %237 = vmatprep.subr.mxu0 0.0
    %238 = vmatpush1.msra.mxu0 0.0
    %239 = vmatprep.subr.mxu0 0.0
    %240 = vmatpush1.msra.mxu0 0.0
    %241 = vmatprep.subr.mxu0 0.0
    %242 = vmatpush1.msra.mxu0 0.0
    %243 = vmatprep.subr.mxu0 0.0
    %244 = vmatpush1.msra.mxu0 0.0
    %245 = vmatprep.subr.mxu0 0.0
    %246 = vmatpush1.msra.mxu0 0.0
    %247 = vmatprep.subr.mxu0 0.0
    %248 = vmatpush1.msra.mxu0 0.0
    %249 = vmatprep.subr.mxu0 0.0
    %250 = vmatpush1.msra.mxu0 0.0
    %251 = vmatprep.subr.mxu0 0.0
    %252 = vmatpush1.msra.mxu0 0.0
    %253 = vmatprep.subr.mxu0 0.0
    %254 = vmatpush1.msra.mxu0 0.0
    %255 = vmatprep.subr.mxu0 0.0
    %256 = vmatpush1.msra.mxu0 0.0
    %257 = vmatprep.subr.mxu0 0.0
    %258 = vmatpush1.msra.mxu0 %v220
    %259 = vmatprep.subr.mxu0 0.0
    %260 = vmatpush1.msra.mxu0 %v218
    %261 = vmatprep.subr.mxu0 0.0
    %262 = vmatpush2.msra.mxu0 0.0
    %263 = vmatprep.subr.mxu0 0.0
    %264 = vmatpush2.msra.mxu0 0.0
    %265 = vmatprep.subr.mxu0 0.0
    %266 = vmatpush2.msra.mxu0 0.0
    %267 = vmatprep.subr.mxu0 0.0
    %268 = vmatpush2.msra.mxu0 0.0
    %269 = vmatprep.subr.mxu0 0.0
    %270 = vmatpush2.msra.mxu0 0.0
    %271 = vmatprep.subr.mxu0 0.0
    %272 = vmatpush2.msra.mxu0 0.0
    %273 = vmatprep.subr.mxu0 0.0
    %274 = vmatpush2.msra.mxu0 0.0
    %275 = vmatprep.subr.mxu0 0.0
    %276 = vmatpush2.msra.mxu0 0.0
    %277 = vmatprep.subr.mxu0 0.0
    %278 = vmatpush2.msra.mxu0 0.0
    %279 = vmatprep.subr.mxu0 0.0
    %280 = vmatpush2.msra.mxu0 0.0
    %281 = vmatprep.subr.mxu0 0.0
    %282 = vmatpush2.msra.mxu0 0.0
    %283 = vmatprep.subr.mxu0 0.0
    %284 = vmatpush2.msra.mxu0 0.0
    %285 = vmatprep.subr.mxu0 0.0
    %286 = vmatpush2.msra.mxu0 0.0
    %287 = vmatprep.subr.mxu0 0.0
    %288 = vmatpush2.msra.mxu0 0.0
    %289 = vmatprep.subr.mxu0 0.0
    %290 = vmatpush2.msra.mxu0 0.0
    %291 = vmatprep.subr.mxu0 0.0
    %292 = vmatpush2.msra.mxu0 0.0
    %293 = vmatprep.mubr.f32.mxu0 0.0
    %294 = vmatmul.mubr.f32.gmra.mxu0 %v224
    %v295 = vpop.f32.mrf.mxu0
    %v296 = vadd.f32 0.0, %v295
    %v297 = vpop.f32.mrf.mxu0
    %298 = vmatprep.mubr.f32.mxu0 0.0
    %299 = vmatmul.mubr.f32.gmra.mxu0 %v227
    %v300 = vpop.f32.mrf.mxu0
    %v301 = vadd.f32 0.0, %v300
    %v302 = vpop.f32.mrf.mxu0
    %303 = vdwg.mxu0
    %304 = vst.msk [vmem:[#allocation2] sm:$0xff] %vm111, %v296
    %305 = vst.msk [vmem:[#allocation2 + $0x8] sm:$0xff] %vm111, %v301
    // Predicated region
    $region14: #{head_forward.1} parent=1 // pred_check
      _
    $region15: #{head_forward.1} parent=1 // pred_check_branch
      %307 = sbr.rel (0) target = $region17
    $region16: #{head_forward.1} parent=1 // pred_region
      %s309 = ssub.s32 256, 256
      %310 = vsyncadd [#allocation3], %s309
      %s311 = sshll.u32 [#allocation2], 4
      %s312 = int_to_ptr.vmem [resolvable:$true] %s311
      %317 = dma.vmem_to_hbm [thread:$0]  %s312, 256, %s3, [#allocation3], 128, 128, 8
    $region17: #{head_forward.1} parent=1 // pred_fallthru
      _
    // Predicated region
    $region18: #{head_forward.1} parent=1 // pred_check
      _
    $region19: #{head_forward.1} parent=1 // pred_check_branch
      %319 = sbr.rel (0) target = $region21
    $region20: #{head_forward.1} parent=1 // pred_region
      %320 = dma.done [#allocation3], 256
    $region21: #{head_forward.1} parent=1 // pred_fallthru
      _
    %321 = vsyncpa [#allocation3], 1

</llo_original>
